<compile_context>
chip_gen: v7x
topology: tpu7x:2x2x1
jax: 0.10.0
libtpu: 0.0.40
codegen_flags: <defaults>
</compile_context>

<pallas_src>
import jax
import jax.numpy as jnp
from jax.experimental import pallas as pl
from jax.experimental.pallas import tpu as pltpu


def _hbm_copy_kernel(x_hbm, o_hbm, sem):
    # Direct HBM -> HBM DMA: streams at DMA-engine bandwidth, no TensorCore
    # work, no VMEM footprint.
    cp = pltpu.make_async_copy(x_hbm, o_hbm, sem)
    cp.start()
    cp.wait()


def _hbm_identity_copy(x):
    """Physical identity copy of `x` via one HBM->HBM DMA (any shape/dtype)."""
    return pl.pallas_call(
        _hbm_copy_kernel,
        out_shape=jax.ShapeDtypeStruct(x.shape, x.dtype),
        in_specs=[pl.BlockSpec(memory_space=pl.ANY)],   # raw HBM ref, no auto-DMA
        out_specs=pl.BlockSpec(memory_space=pl.ANY),    # raw HBM ref, no auto-DMA
        scratch_shapes=[pltpu.SemaphoreType.DMA],
    )(x)


def critic_forward(x):
    """Pallas implementation of Critic.forward (identity), materialized copy."""
    return _hbm_identity_copy(x)


class Critic:
    """JAX/Pallas port of the PyTorch Critic (Wasserstein critic stub).

    The original module holds no parameters; __init__ only records sizes.
    The PyTorch forward prints a message and returns `x` unchanged.
    """

    def __init__(self, x_size, y_size, materialize=True):
        self.x_size = x_size
        self.y_size = y_size
        self.materialize = materialize

    def __call__(self, x):
        # TODO(synk): the original forward's `print(...)` side-effect is
        # intentionally omitted to keep the forward pure.
        if not self.materialize:
            # Perf-review item #1: the forward is a pure identity, so the
            # cheapest correct implementation is to return x (no HBM traffic,
            # no output allocation).
            return x
        return critic_forward(x)


if __name__ == "__main__":
    key = jax.random.PRNGKey(0)

    # Shapes consistent with the module's ctor: rows of x_size + y_size.
    x_size, y_size = 16, 16
    batch = 8
    x = jax.random.normal(key, (batch, x_size + y_size), dtype=jnp.float32)

    # Default: exercise the Pallas HBM->HBM DMA identity kernel.
    critic = Critic(x_size, y_size)
    out = jax.block_until_ready(critic(x))
    assert out.shape == x.shape and out.dtype == x.dtype
    assert bool(jnp.all(out == x))

    # Zero-cost path (review's primary recommendation): just returns x.
    critic_fast = Critic(x_size, y_size, materialize=False)
    out_fast = critic_fast(x)
    assert out_fast.shape == x.shape and bool(jnp.all(out_fast == x))

    # bf16 path through the same DMA kernel (no dtype-specific tiling needed).
    x2 = jax.random.normal(jax.random.PRNGKey(0), (64, 96), dtype=jnp.bfloat16)
    out2 = jax.block_until_ready(critic_forward(x2))
    assert out2.shape == x2.shape and out2.dtype == x2.dtype
    assert bool(jnp.all(out2 == x2))

    # Arbitrary, non-128-divisible shape (the old fallback hazard): still just
    # one HBM->HBM DMA, no VMEM blocks involved.
    x3 = jax.random.normal(jax.random.PRNGKey(0), (7, 33), dtype=jnp.float32)
    out3 = jax.block_until_ready(critic_forward(x3))
    assert out3.shape == x3.shape and bool(jnp.all(out3 == x3))

    print("KERNEL_OK")
</pallas_src>

<mosaic_0001>
module attributes {stable_mosaic.version = 11 : i64} {
  func.func @_hbm_copy_kernel(%arg0: memref<8x32xf32, #tpu.memory_space<any>>, %arg1: memref<8x32xf32, #tpu.memory_space<any>>, %arg2: memref<!tpu.dma_semaphore, #tpu.memory_space<semaphore_mem>>) attributes {dimension_semantics = [], scalar_prefetch = 0 : i64, scratch_operands = 1 : i64, tpu.core_type = #tpu.core_type<tc>} {
    tpu.enqueue_dma source(%arg0 : memref<8x32xf32, #tpu.memory_space<any>>) target(%arg1 : memref<8x32xf32, #tpu.memory_space<any>>) target_semaphore(%arg2 : memref<!tpu.dma_semaphore, #tpu.memory_space<semaphore_mem>>)
    tpu.wait_dma2 semaphore(%arg2 : memref<!tpu.dma_semaphore, #tpu.memory_space<semaphore_mem>>) src(%arg0 : memref<8x32xf32, #tpu.memory_space<any>>) dst(%arg1 : memref<8x32xf32, #tpu.memory_space<any>>)
    return
  }
}

</mosaic_0001>

<llo_original>
// kernel: tpu_custom_call.1
$region0: #{tpu_custom_call.1}
  #allocation0 [shape = 'u32[]', space=smem, size = 0x4, offset = 0x4, fixed_abs, tag = 'smem constant byte address 0x4 - core index']
  #allocation1 [shape = 'u32[144,128]{1,0:T(1,128)}', space=vmem, size = 0x12000, scoped, tag = 'internal scratch']
  #allocation2 [shape = 's32[1]{0}', space=sflag, size = 0x4, scoped, tag = 'scratch operand']
  #allocation3 [shape = 's32[]', space=sflag, size = 0x4, offset = 0, fixed_abs, tag = 'sflag constant byte address 0x0 - dummy sync flag']
  #allocation4 [shape = 'u32[0]{0}', space=smem, size = 0, offset = 0, fixed_abs, tag = 'smem constant byte address 0x0 - null']
  %s0 = inlined_call_operand.hbm [shape: f32[8,32], index: 0, kind: input, shape index: {}]
  %s1 = inlined_call_operand.hbm [shape: f32[8,32], index: 1, kind: output, shape index: {}]
  %s2 = sld [smem:[#allocation0]]
  $region2: #{tpu_custom_call.1} parent=0
    _
  %s4 = ssub.s32 1, %s2
  %s5 = scalar_select 0, %s4, %s2
  %s7 = sshll.u32 1, 14
  %s8 = sxor.u32 4294967295, %s7
  %s11 = sshll.u32 3, 24
  %s12 = sxor.u32 4294967295, %s11
  %s13 = sand.u32 0, %s12
  %s15 = sor.u32 %s13, 0
  %18 = dma.general %s0, 128, %s1, [#allocation2], [#allocation3], [#allocation4], %s15, 0
  %s19 = smul.u32 8, 1
  %s20 = sshll.u32 %s19, 4
  %21 = dma.done [#allocation2], %s20
  %22 = vsyncmov [#allocation2]
  %s23 = vpop.sfrf %22
  %p24 = scmp.eq.s32.totalorder %s23, 0
  %p25 = pneg %p24
  %27 = shalt.err (%p25)

</llo_original>
